<compile_context>
chip_gen: v7x
topology: tpu7x:2x2x1
jax: 0.10.0
libtpu: 0.0.40
codegen_flags: <defaults>
</compile_context>

<pallas_src>
from functools import partial

import jax
import jax.numpy as jnp
from jax.experimental import pallas as pl
from jax.experimental.pallas import tpu as pltpu

NEG_SLOPE = 0.01  # nn.LeakyReLU() default


# ---------------------------------------------------------------------------
# Kernel 1: recompute 1x1x1 conv on a (Cin, tile_s) tile and accumulate
# per-channel sum / sum-of-squares partials (per batch element).
# grid = (N, n_spatial_tiles): axis 0 "parallel", axis 1 "arbitrary"
# (stats blocks are resident accumulators across the spatial tiles).
# ---------------------------------------------------------------------------
def _stats_kernel(x_ref, y_ref, w1_ref, w2_ref, sum_ref, sq_ref,
                  *, dhw, tile_s, need_mask):
    s_idx = pl.program_id(1)

    @pl.when(s_idx == 0)
    def _():
        sum_ref[...] = jnp.zeros_like(sum_ref)
        sq_ref[...] = jnp.zeros_like(sq_ref)

    # (Cout, Cin) @ (Cin, T) twice -> (Cout, T); conv bias omitted (cancels in BN).
    conv = (jnp.dot(w1_ref[...], x_ref[...], preferred_element_type=jnp.float32)
            + jnp.dot(w2_ref[...], y_ref[...], preferred_element_type=jnp.float32))

    if need_mask:
        # Ragged last spatial tile: garbage lanes must not pollute the stats.
        lane = jax.lax.broadcasted_iota(jnp.int32, conv.shape, 1)
        valid = (s_idx * tile_s + lane) < dhw
        conv = jnp.where(valid, conv, 0.0)

    sum_ref[...] += jnp.sum(conv, axis=1, keepdims=True)          # (Cout, 1)
    sq_ref[...] += jnp.sum(conv * conv, axis=1, keepdims=True)    # (Cout, 1)


# ---------------------------------------------------------------------------
# Kernel 2: recompute the conv, apply folded BN scale/shift, LeakyReLU, and
# write the output directly in (N, Cout, DHW) == NCDHW layout.
# ---------------------------------------------------------------------------
def _conv_bn_lrelu_kernel(x_ref, y_ref, w1_ref, w2_ref, scale_ref, shift_ref, o_ref):
    z = (jnp.dot(w1_ref[...], x_ref[...], preferred_element_type=jnp.float32)
         + jnp.dot(w2_ref[...], y_ref[...], preferred_element_type=jnp.float32))
    z = z * scale_ref[...] + shift_ref[...]
    o_ref[...] = jnp.where(z >= 0, z, NEG_SLOPE * z).astype(o_ref.dtype)


def changedim_forward(x, y, w, b, gamma, beta, *, eps=1e-5, target_tile_s=32768):
    """x, y: (N, Cin, D, H, W) f32; w: (Cout, 2*Cin); b/gamma/beta: (Cout,)."""
    del b  # conv bias cancels exactly under training-mode BatchNorm
    N, Cin, D, H, W = x.shape
    Cout = w.shape[0]
    DHW = D * H * W

    # Free reshapes only (no transpose): NCDHW is already channels-on-sublane.
    xs = x.reshape(N, Cin, DHW).astype(jnp.float32)
    ys = y.reshape(N, Cin, DHW).astype(jnp.float32)
    w1 = w[:, :Cin].astype(jnp.float32)      # (Cout, Cin) — acts on x
    w2 = w[:, Cin:].astype(jnp.float32)      # (Cout, Cin) — acts on y

    tile_s = min(target_tile_s, DHW)         # lane-dense (multiple of 128) or full extent
    n_s = pl.cdiv(DHW, tile_s)
    need_mask = (DHW % tile_s) != 0

    vmem_cap = 32 * 1024 * 1024

    # --- pass 1: per-batch partial channel sums / sums of squares ---
    part_sum, part_sq = pl.pallas_call(
        partial(_stats_kernel, dhw=DHW, tile_s=tile_s, need_mask=need_mask),
        out_shape=(
            jax.ShapeDtypeStruct((N, Cout, 1), jnp.float32),
            jax.ShapeDtypeStruct((N, Cout, 1), jnp.float32),
        ),
        grid_spec=pltpu.PrefetchScalarGridSpec(
            num_scalar_prefetch=0,
            grid=(N, n_s),
            in_specs=[
                pl.BlockSpec((None, Cin, tile_s), lambda n, s: (n, 0, s)),
                pl.BlockSpec((None, Cin, tile_s), lambda n, s: (n, 0, s)),
                pl.BlockSpec((Cout, Cin), lambda n, s: (0, 0)),
                pl.BlockSpec((Cout, Cin), lambda n, s: (0, 0)),
            ],
            out_specs=[
                pl.BlockSpec((None, Cout, 1), lambda n, s: (n, 0, 0)),
                pl.BlockSpec((None, Cout, 1), lambda n, s: (n, 0, 0)),
            ],
        ),
        compiler_params=pltpu.CompilerParams(
            dimension_semantics=("parallel", "arbitrary"),
            vmem_limit_bytes=vmem_cap),
    )(xs, ys, w1, w2)

    # --- glue: finalize BN stats (biased var, training mode), fold into scale/shift ---
    count = jnp.float32(N * DHW)
    ch_sum = jnp.sum(part_sum[:, :, 0], axis=0)                     # (Cout,)
    ch_sq = jnp.sum(part_sq[:, :, 0], axis=0)                       # (Cout,)
    mean = ch_sum / count
    var = jnp.maximum(ch_sq / count - mean * mean, 0.0)             # clamp cancellation
    inv = jax.lax.rsqrt(var + eps)
    g = gamma.astype(jnp.float32)
    scale = (g * inv).reshape(Cout, 1)
    shift = (beta.astype(jnp.float32) - mean * g * inv).reshape(Cout, 1)

    # --- pass 2: conv recompute + folded BN affine + LeakyReLU, NCDHW output ---
    out = pl.pallas_call(
        _conv_bn_lrelu_kernel,
        out_shape=jax.ShapeDtypeStruct((N, Cout, DHW), jnp.float32),
        grid_spec=pltpu.PrefetchScalarGridSpec(
            num_scalar_prefetch=0,
            grid=(N, n_s),
            in_specs=[
                pl.BlockSpec((None, Cin, tile_s), lambda n, s: (n, 0, s)),
                pl.BlockSpec((None, Cin, tile_s), lambda n, s: (n, 0, s)),
                pl.BlockSpec((Cout, Cin), lambda n, s: (0, 0)),
                pl.BlockSpec((Cout, Cin), lambda n, s: (0, 0)),
                pl.BlockSpec((Cout, 1), lambda n, s: (0, 0)),
                pl.BlockSpec((Cout, 1), lambda n, s: (0, 0)),
            ],
            out_specs=pl.BlockSpec((None, Cout, tile_s), lambda n, s: (n, 0, s)),
        ),
        compiler_params=pltpu.CompilerParams(
            dimension_semantics=("parallel", "parallel"),
            vmem_limit_bytes=vmem_cap),
    )(xs, ys, w1, w2, scale, shift)

    return out.reshape(N, Cout, D, H, W)


def _reference(x, y, w, b, gamma, beta, eps=1e-5):
    """Pure-JAX reference of the PyTorch forward (conv bias included)."""
    xc = jnp.concatenate([x, y], axis=1)
    Cin2 = xc.shape[1]
    Cout = w.shape[0]
    xs = jnp.transpose(xc, (0, 2, 3, 4, 1)).reshape(-1, Cin2)
    y1 = xs @ w.T + b.reshape(1, Cout)
    mean = jnp.mean(y1, axis=0, keepdims=True)
    var = jnp.mean(y1 * y1, axis=0, keepdims=True) - mean * mean
    z = (y1 - mean) * jax.lax.rsqrt(var + eps) * gamma.reshape(1, Cout) + beta.reshape(1, Cout)
    z = jnp.where(z >= 0, z, NEG_SLOPE * z)
    N, _, D, H, W = x.shape
    return jnp.transpose(z.reshape(N, D, H, W, Cout), (0, 4, 1, 2, 3))


if __name__ == "__main__":
    # Small shapes: N=2, Cin=4, D=H=W=4, Cout=8  -> DHW = 64
    N, Cin, D, H, W = 2, 4, 4, 4, 4
    Cout = 8
    Cin2 = 2 * Cin

    key = jax.random.PRNGKey(0)
    kx, ky, kw, kb = jax.random.split(key, 4)

    x = jax.random.normal(kx, (N, Cin, D, H, W), dtype=jnp.float32)
    y = jax.random.normal(ky, (N, Cin, D, H, W), dtype=jnp.float32)

    bound = 1.0 / (Cin2 ** 0.5)
    w = jax.random.uniform(kw, (Cout, Cin2), jnp.float32, -bound, bound)
    b = jax.random.uniform(kb, (Cout,), jnp.float32, -bound, bound)
    gamma = jnp.ones((Cout,), jnp.float32)   # BatchNorm3d default weight
    beta = jnp.zeros((Cout,), jnp.float32)   # BatchNorm3d default bias

    out = changedim_forward(x, y, w, b, gamma, beta)
    jax.block_until_ready(out)

    assert out.shape == (N, Cout, D, H, W)
    assert out.dtype == jnp.float32

    ref = _reference(x, y, w, b, gamma, beta)
    assert bool(jnp.allclose(out, ref, rtol=1e-3, atol=1e-4)), "mismatch vs reference"

    print("KERNEL_OK")
</pallas_src>

<mosaic_0001>
module attributes {stable_mosaic.version = 11 : i64} {
  func.func @_stats_kernel(%arg0: i32, %arg1: i32, %arg2: memref<1x4x64xf32, #tpu.memory_space<vmem>>, %arg3: memref<1x4x64xf32, #tpu.memory_space<vmem>>, %arg4: memref<8x4xf32, #tpu.memory_space<vmem>>, %arg5: memref<8x4xf32, #tpu.memory_space<vmem>>, %arg6: memref<1x8x1xf32, #tpu.memory_space<vmem>>, %arg7: memref<1x8x1xf32, #tpu.memory_space<vmem>>) attributes {dimension_semantics = [#tpu.dimension_semantics<parallel>, #tpu.dimension_semantics<arbitrary>], iteration_bounds = array<i64: 2, 1>, scalar_prefetch = 0 : i64, scratch_operands = 0 : i64, tpu.core_type = #tpu.core_type<tc>, window_params = [{transform_indices = @transform_0, window_bounds = array<i64: 1, 4, 64>}, {transform_indices = @transform_1, window_bounds = array<i64: 1, 4, 64>}, {pipeline_mode = #tpu.pipeline_mode<synchronous>, transform_indices = @transform_2, window_bounds = array<i64: 8, 4>}, {pipeline_mode = #tpu.pipeline_mode<synchronous>, transform_indices = @transform_3, window_bounds = array<i64: 8, 4>}, {transform_indices = @transform_4, window_bounds = array<i64: 1, 8, 1>}, {transform_indices = @transform_5, window_bounds = array<i64: 1, 8, 1>}]} {
    %c0_i32 = arith.constant 0 : i32
    %0 = arith.cmpi eq, %arg1, %c0_i32 : i32
    %1 = arith.extui %0 : i1 to i32
    %c0_i32_0 = arith.constant 0 : i32
    %2 = arith.cmpi ne, %1, %c0_i32_0 : i32
    scf.if %2 {
      %cst_25 = arith.constant 0.000000e+00 : f32
      %29 = vector.broadcast %cst_25 : f32 to vector<8x1xf32>
      %c0_26 = arith.constant 0 : index
      %c0_27 = arith.constant 0 : index
      %c0_28 = arith.constant 0 : index
      %30 = vector.load %arg6[%c0_26, %c0_27, %c0_28] : memref<1x8x1xf32, #tpu.memory_space<vmem>>, vector<1x8x1xf32>
      %31 = vector.shape_cast %30 : vector<1x8x1xf32> to vector<8x1xf32>
      %32 = vector.shape_cast %29 : vector<8x1xf32> to vector<1x8x1xf32>
      tpu.vector_store %arg6[%c0_26, %c0_27, %c0_28], %32 {strides = array<i32>} : memref<1x8x1xf32, #tpu.memory_space<vmem>>, vector<1x8x1xf32>,
      %cst_29 = arith.constant 0.000000e+00 : f32
      %33 = vector.broadcast %cst_29 : f32 to vector<8x1xf32>
      %c0_30 = arith.constant 0 : index
      %c0_31 = arith.constant 0 : index
      %c0_32 = arith.constant 0 : index
      %34 = vector.load %arg7[%c0_30, %c0_31, %c0_32] : memref<1x8x1xf32, #tpu.memory_space<vmem>>, vector<1x8x1xf32>
      %35 = vector.shape_cast %34 : vector<1x8x1xf32> to vector<8x1xf32>
      %36 = vector.shape_cast %33 : vector<8x1xf32> to vector<1x8x1xf32>
      tpu.vector_store %arg7[%c0_30, %c0_31, %c0_32], %36 {strides = array<i32>} : memref<1x8x1xf32, #tpu.memory_space<vmem>>, vector<1x8x1xf32>,
    } else {
    }
    %c0 = arith.constant 0 : index
    %c0_1 = arith.constant 0 : index
    %3 = vector.load %arg4[%c0, %c0_1] : memref<8x4xf32, #tpu.memory_space<vmem>>, vector<8x4xf32>
    %c0_2 = arith.constant 0 : index
    %c0_3 = arith.constant 0 : index
    %c0_4 = arith.constant 0 : index
    %4 = vector.load %arg2[%c0_2, %c0_3, %c0_4] : memref<1x4x64xf32, #tpu.memory_space<vmem>>, vector<1x4x64xf32>
    %5 = vector.shape_cast %4 : vector<1x4x64xf32> to vector<4x64xf32>
    %cst = arith.constant dense<0.000000e+00> : vector<8x64xf32>
    %6 = tpu.matmul %3, %5, %cst {dimension_numbers = #tpu.dot_dimension_numbers<[1], [0], [0], [1], [0, 0, 1, 1], [], []>} : vector<8x4xf32>, vector<4x64xf32>, vector<8x64xf32> -> vector<8x64xf32>
    %c0_5 = arith.constant 0 : index
    %c0_6 = arith.constant 0 : index
    %7 = vector.load %arg5[%c0_5, %c0_6] : memref<8x4xf32, #tpu.memory_space<vmem>>, vector<8x4xf32>
    %c0_7 = arith.constant 0 : index
    %c0_8 = arith.constant 0 : index
    %c0_9 = arith.constant 0 : index
    %8 = vector.load %arg3[%c0_7, %c0_8, %c0_9] : memref<1x4x64xf32, #tpu.memory_space<vmem>>, vector<1x4x64xf32>
    %9 = vector.shape_cast %8 : vector<1x4x64xf32> to vector<4x64xf32>
    %cst_10 = arith.constant dense<0.000000e+00> : vector<8x64xf32>
    %10 = tpu.matmul %7, %9, %cst_10 {dimension_numbers = #tpu.dot_dimension_numbers<[1], [0], [0], [1], [0, 0, 1, 1], [], []>} : vector<8x4xf32>, vector<4x64xf32>, vector<8x64xf32> -> vector<8x64xf32>
    %11 = arith.addf %6, %10 : vector<8x64xf32>
    %c0_11 = arith.constant 0 : index
    %c0_12 = arith.constant 0 : index
    %c0_13 = arith.constant 0 : index
    %12 = vector.load %arg6[%c0_11, %c0_12, %c0_13] : memref<1x8x1xf32, #tpu.memory_space<vmem>>, vector<1x8x1xf32>
    %13 = vector.shape_cast %12 : vector<1x8x1xf32> to vector<8x1xf32>
    %cst_14 = arith.constant dense<0.000000e+00> : vector<8xf32>
    %14 = vector.multi_reduction <add>, %11, %cst_14 [1] : vector<8x64xf32> to vector<8xf32>
    %15 = vector.shape_cast %14 : vector<8xf32> to vector<8x1xf32>
    %16 = arith.addf %13, %15 : vector<8x1xf32>
    %c0_15 = arith.constant 0 : index
    %c0_16 = arith.constant 0 : index
    %c0_17 = arith.constant 0 : index
    %17 = vector.load %arg6[%c0_15, %c0_16, %c0_17] : memref<1x8x1xf32, #tpu.memory_space<vmem>>, vector<1x8x1xf32>
    %18 = vector.shape_cast %17 : vector<1x8x1xf32> to vector<8x1xf32>
    %19 = vector.shape_cast %16 : vector<8x1xf32> to vector<1x8x1xf32>
    tpu.vector_store %arg6[%c0_15, %c0_16, %c0_17], %19 {strides = array<i32>} : memref<1x8x1xf32, #tpu.memory_space<vmem>>, vector<1x8x1xf32>,
    %c0_18 = arith.constant 0 : index
    %c0_19 = arith.constant 0 : index
    %c0_20 = arith.constant 0 : index
    %20 = vector.load %arg7[%c0_18, %c0_19, %c0_20] : memref<1x8x1xf32, #tpu.memory_space<vmem>>, vector<1x8x1xf32>
    %21 = vector.shape_cast %20 : vector<1x8x1xf32> to vector<8x1xf32>
    %22 = arith.mulf %11, %11 : vector<8x64xf32>
    %cst_21 = arith.constant dense<0.000000e+00> : vector<8xf32>
    %23 = vector.multi_reduction <add>, %22, %cst_21 [1] : vector<8x64xf32> to vector<8xf32>
    %24 = vector.shape_cast %23 : vector<8xf32> to vector<8x1xf32>
    %25 = arith.addf %21, %24 : vector<8x1xf32>
    %c0_22 = arith.constant 0 : index
    %c0_23 = arith.constant 0 : index
    %c0_24 = arith.constant 0 : index
    %26 = vector.load %arg7[%c0_22, %c0_23, %c0_24] : memref<1x8x1xf32, #tpu.memory_space<vmem>>, vector<1x8x1xf32>
    %27 = vector.shape_cast %26 : vector<1x8x1xf32> to vector<8x1xf32>
    %28 = vector.shape_cast %25 : vector<8x1xf32> to vector<1x8x1xf32>
    tpu.vector_store %arg7[%c0_22, %c0_23, %c0_24], %28 {strides = array<i32>} : memref<1x8x1xf32, #tpu.memory_space<vmem>>, vector<1x8x1xf32>,
    return
  }
  func.func @transform_0(%arg0: i32, %arg1: i32) -> (i32, i32, i32) {
    %c0_i32 = arith.constant 0 : i32
    %c0_i32_0 = arith.constant 0 : i32
    return %arg0, %c0_i32, %arg1 : i32, i32, i32
  }
  func.func @transform_1(%arg0: i32, %arg1: i32) -> (i32, i32, i32) {
    %c0_i32 = arith.constant 0 : i32
    %c0_i32_0 = arith.constant 0 : i32
    return %arg0, %c0_i32, %arg1 : i32, i32, i32
  }
  func.func @transform_2(%arg0: i32, %arg1: i32) -> (i32, i32) {
    %c0_i32 = arith.constant 0 : i32
    %c0_i32_0 = arith.constant 0 : i32
    %c0_i32_1 = arith.constant 0 : i32
    return %c0_i32, %c0_i32_0 : i32, i32
  }
  func.func @transform_3(%arg0: i32, %arg1: i32) -> (i32, i32) {
    %c0_i32 = arith.constant 0 : i32
    %c0_i32_0 = arith.constant 0 : i32
    %c0_i32_1 = arith.constant 0 : i32
    return %c0_i32, %c0_i32_0 : i32, i32
  }
  func.func @transform_4(%arg0: i32, %arg1: i32) -> (i32, i32, i32) {
    %c0_i32 = arith.constant 0 : i32
    %c0_i32_0 = arith.constant 0 : i32
    %c0_i32_1 = arith.constant 0 : i32
    return %arg0, %c0_i32, %c0_i32_0 : i32, i32, i32
  }
  func.func @transform_5(%arg0: i32, %arg1: i32) -> (i32, i32, i32) {
    %c0_i32 = arith.constant 0 : i32
    %c0_i32_0 = arith.constant 0 : i32
    %c0_i32_1 = arith.constant 0 : i32
    return %arg0, %c0_i32, %c0_i32_0 : i32, i32, i32
  }
}

</mosaic_0001>

<llo_original>
// kernel: tpu_custom_call.1
$region0: #{tpu_custom_call.1}
  #allocation0 [shape = 'u32[]', space=smem, size = 0x4, offset = 0x4, fixed_abs, tag = 'smem constant byte address 0x4 - core index']
  #allocation1 [shape = 'u32[144,128]{1,0:T(1,128)}', space=vmem, size = 0x12000, scoped, tag = 'internal scratch']
  %s0 = inlined_call_operand.vmem [shape: f32[2,4,64], index: 0, kind: input, shape index: {}]
  %s1 = inlined_call_operand.vmem [shape: f32[2,4,64], index: 1, kind: input, shape index: {}]
  %s2 = inlined_call_operand.vmem [shape: f32[8,4], index: 2, kind: input, shape index: {}]
  %s3 = inlined_call_operand.vmem [shape: f32[8,4], index: 3, kind: input, shape index: {}]
  %s4 = inlined_call_operand.vmem [shape: f32[2,8,1], index: 4, kind: output, shape index: {0}]
  %s5 = inlined_call_operand.vmem [shape: f32[2,8,1], index: 5, kind: output, shape index: {1}]
  %6 = xla_tuple %s4, %s5
  %s7 = sld [smem:[#allocation0]]
  $region61: #{tpu_custom_call.1} parent=0
    _
  %s9 = ssub.s32 1, %s7
  %s10 = scalar_select 0, %s9, %s7
  loop: start=0, step=1, limit=4
  $region2: #{tpu_custom_call.1} parent=0 // loop_pre_header
    _
  $region3: #{tpu_custom_call.1} parent=0 // loop_header
    %s12 = sphi 0, %s16
    %p13 = scmp.ge.s32.totalorder %s12, 4
    %s19 = sphi 0, %s31
    %s20 = sphi 0, %s27
    %s21 = sphi 0, %s19
    %s22 = sphi 0, %s20
    %s23 = sphi 0, %s21
    %s24 = sphi 0, %s22
    %s36 = sphi 0, %s38
    %s39 = sphi 0, %s36
    %s40 = sphi 0, %s39
    %s56 = sphi 0, %s40
    %s64 = sphi 0, %s66
    %s67 = sphi 0, %s64
    %s68 = sphi 0, %s67
    %s84 = sphi 0, %s68
    %s88 = sphi 0, %s88
    %s90 = sphi 0, %s88
    %s91 = sphi 0, %s90
    %s105 = sphi 0, %s91
    %s109 = sphi 0, %s109
    %s111 = sphi 0, %s109
    %s112 = sphi 0, %s111
    %s126 = sphi 0, %s112
    %s132 = sphi 0, %s134
    %s135 = sphi 0, %s132
    %s136 = sphi 0, %s135
    %s152 = sphi 0, %s136
    %s158 = sphi 0, %s160
    %s161 = sphi 0, %s158
    %s162 = sphi 0, %s161
    %s178 = sphi 0, %s162
  $region4: #{tpu_custom_call.1} parent=0 // loop_header_branch
    %15 = sbr.rel (%p13) target = $region8
  $region5: #{tpu_custom_call.1} parent=0 // loop_body
    %s17 = ssub.s32 %s12, 1
    %s18 = ssub.s32 %s12, 2
    %s25 = sadd.s32 1, %s20
    %p26 = scmp.ge.s32.totalorder %s25, 1
    %s27 = scalar_select %p26, 0, %s25
    %s28 = sadd.s32 1, %s19
    %s29 = scalar_select %p26, %s28, %s19
    %p30 = scmp.ge.s32.totalorder %s29, 2
    %s31 = scalar_select %p30, 0, %s29
    %s32 = ssub.s32 %s19, %s31
    %s33 = ssub.s32 %s20, %s27
    %s34 = sor.u32 %s32, %s33
    %p35 = scmp.eq.s32.totalorder %s34, 0
    %s37 = sadd.s32 %s36, 1
    %s38 = scalar_select %p35, %s36, %s37
    %p41 = pneg %p35
    %p42 = scmp.eq.s32.totalorder %s12, 1
    %p43 = por %p41, %p42
    %p44 = scmp.ne.s32.totalorder %s36, %s39
    %p45 = scmp.eq.s32.totalorder %s12, 0
    %p46 = por %p44, %p45
    %p47 = scmp.ne.s32.totalorder %s36, %s39
    %p48 = scmp.eq.s32.totalorder %s17, 1
    %p49 = por %p47, %p48
    %p50 = scmp.ne.s32.totalorder %s39, %s40
    %p51 = scmp.eq.s32.totalorder %s17, 0
    %p52 = por %p50, %p51
    %p53 = scmp.ne.s32.totalorder %s39, %s40
    %p54 = scmp.eq.s32.totalorder %s18, 1
    %p55 = por %p53, %p54
    %p57 = scmp.ne.s32.totalorder %s40, %s56
    %p58 = scmp.eq.s32.totalorder %s18, 0
    %p59 = por %p57, %p58
    %s60 = ssub.s32 %s19, %s31
    %s61 = ssub.s32 %s20, %s27
    %s62 = sor.u32 %s60, %s61
    %p63 = scmp.eq.s32.totalorder %s62, 0
    %s65 = sadd.s32 %s64, 1
    %s66 = scalar_select %p63, %s64, %s65
    %p69 = pneg %p63
    %p70 = scmp.eq.s32.totalorder %s12, 1
    %p71 = por %p69, %p70
    %p72 = scmp.ne.s32.totalorder %s64, %s67
    %p73 = scmp.eq.s32.totalorder %s12, 0
    %p74 = por %p72, %p73
    %p75 = scmp.ne.s32.totalorder %s64, %s67
    %p76 = scmp.eq.s32.totalorder %s17, 1
    %p77 = por %p75, %p76
    %p78 = scmp.ne.s32.totalorder %s67, %s68
    %p79 = scmp.eq.s32.totalorder %s17, 0
    %p80 = por %p78, %p79
    %p81 = scmp.ne.s32.totalorder %s67, %s68
    %p82 = scmp.eq.s32.totalorder %s18, 1
    %p83 = por %p81, %p82
    %p85 = scmp.ne.s32.totalorder %s68, %s84
    %p86 = scmp.eq.s32.totalorder %s18, 0
    %p87 = por %p85, %p86
    %s89 = sadd.s32 %s88, 1
    %p92 = scmp.eq.s32.totalorder %s12, 1
    %p93 = scmp.ne.s32.totalorder %s88, %s90
    %p94 = scmp.eq.s32.totalorder %s12, 0
    %p95 = por %p93, %p94
    %p96 = scmp.ne.s32.totalorder %s88, %s90
    %p97 = scmp.eq.s32.totalorder %s17, 1
    %p98 = por %p96, %p97
    %p99 = scmp.ne.s32.totalorder %s90, %s91
    %p100 = scmp.eq.s32.totalorder %s17, 0
    %p101 = por %p99, %p100
    %p102 = scmp.ne.s32.totalorder %s90, %s91
    %p103 = scmp.eq.s32.totalorder %s18, 1
    %p104 = por %p102, %p103
    %p106 = scmp.ne.s32.totalorder %s91, %s105
    %p107 = scmp.eq.s32.totalorder %s18, 0
    %p108 = por %p106, %p107
    %s110 = sadd.s32 %s109, 1
    %p113 = scmp.eq.s32.totalorder %s12, 1
    %p114 = scmp.ne.s32.totalorder %s109, %s111
    %p115 = scmp.eq.s32.totalorder %s12, 0
    %p116 = por %p114, %p115
    %p117 = scmp.ne.s32.totalorder %s109, %s111
    %p118 = scmp.eq.s32.totalorder %s17, 1
    %p119 = por %p117, %p118
    %p120 = scmp.ne.s32.totalorder %s111, %s112
    %p121 = scmp.eq.s32.totalorder %s17, 0
    %p122 = por %p120, %p121
    %p123 = scmp.ne.s32.totalorder %s111, %s112
    %p124 = scmp.eq.s32.totalorder %s18, 1
    %p125 = por %p123, %p124
    %p127 = scmp.ne.s32.totalorder %s112, %s126
    %p128 = scmp.eq.s32.totalorder %s18, 0
    %p129 = por %p127, %p128
    %s130 = ssub.s32 %s19, %s31
    %p131 = scmp.eq.s32.totalorder %s130, 0
    %s133 = sadd.s32 %s132, 1
    %s134 = scalar_select %p131, %s132, %s133
    %p137 = pneg %p131
    %p138 = scmp.eq.s32.totalorder %s12, 1
    %p139 = por %p137, %p138
    %p140 = scmp.ne.s32.totalorder %s132, %s135
    %p141 = scmp.eq.s32.totalorder %s12, 0
    %p142 = por %p140, %p141
    %p143 = scmp.ne.s32.totalorder %s132, %s135
    %p144 = scmp.eq.s32.totalorder %s17, 1
    %p145 = por %p143, %p144
    %p146 = scmp.ne.s32.totalorder %s135, %s136
    %p147 = scmp.eq.s32.totalorder %s17, 0
    %p148 = por %p146, %p147
    %p149 = scmp.ne.s32.totalorder %s135, %s136
    %p150 = scmp.eq.s32.totalorder %s18, 1
    %p151 = por %p149, %p150
    %p153 = scmp.ne.s32.totalorder %s136, %s152
    %p154 = scmp.eq.s32.totalorder %s18, 0
    %p155 = por %p153, %p154
    %s156 = ssub.s32 %s19, %s31
    %p157 = scmp.eq.s32.totalorder %s156, 0
    %s159 = sadd.s32 %s158, 1
    %s160 = scalar_select %p157, %s158, %s159
    %p163 = pneg %p157
    %p164 = scmp.eq.s32.totalorder %s12, 1
    %p165 = por %p163, %p164
    %p166 = scmp.ne.s32.totalorder %s158, %s161
    %p167 = scmp.eq.s32.totalorder %s12, 0
    %p168 = por %p166, %p167
    %p169 = scmp.ne.s32.totalorder %s158, %s161
    %p170 = scmp.eq.s32.totalorder %s17, 1
    %p171 = por %p169, %p170
    %p172 = scmp.ne.s32.totalorder %s161, %s162
    %p173 = scmp.eq.s32.totalorder %s17, 0
    %p174 = por %p172, %p173
    %p175 = scmp.ne.s32.totalorder %s161, %s162
    %p176 = scmp.eq.s32.totalorder %s18, 1
    %p177 = por %p175, %p176
    %p179 = scmp.ne.s32.totalorder %s162, %s178
    %p180 = scmp.eq.s32.totalorder %s18, 0
    %p181 = por %p179, %p180
    %p182 = scmp.le.s32.totalorder 1, %s12
    %p183 = scmp.lt.s32.totalorder %s12, 3
    %p184 = pnand %p182, %p183
    %p185 = pneg %p184
    // Predicated region
    $region9: #{tpu_custom_call.1} parent=5 // pred_check
      _
    $region10: #{tpu_custom_call.1} parent=5 // pred_check_branch
      %187 = sbr.rel (%p184) target = $region12
    $region11: #{tpu_custom_call.1} parent=5 // pred_region
      %s188 = ssub.s32 %s12, 1
      // Predicated region
      $region13: #{tpu_custom_call.1} parent=11 // pred_check
        %p189 = pneg %p101
      $region14: #{tpu_custom_call.1} parent=11 // pred_check_branch
        %191 = sbr.rel (%p189) target = $region16
      $region15: #{tpu_custom_call.1} parent=11 // pred_region
        _
      $region16: #{tpu_custom_call.1} parent=11 // pred_fallthru
        _
      // Predicated region
      $region17: #{tpu_custom_call.1} parent=11 // pred_check
        %p192 = pneg %p122
      $region18: #{tpu_custom_call.1} parent=11 // pred_check_branch
        %194 = sbr.rel (%p192) target = $region20
      $region19: #{tpu_custom_call.1} parent=11 // pred_region
        _
      $region20: #{tpu_custom_call.1} parent=11 // pred_fallthru
        _
    $region12: #{tpu_custom_call.1} parent=5 // pred_fallthru
      _
    %p195 = scmp.lt.s32.totalorder %s12, 2
    // Predicated region
    $region21: #{tpu_custom_call.1} parent=5 // pred_check
      %p196 = pneg %p195
    $region22: #{tpu_custom_call.1} parent=5 // pred_check_branch
      %198 = sbr.rel (%p196) target = $region24
    $region23: #{tpu_custom_call.1} parent=5 // pred_region
      // Predicated region
      $region25: #{tpu_custom_call.1} parent=23 // pred_check
        %p199 = pneg %p46
      $region26: #{tpu_custom_call.1} parent=23 // pred_check_branch
        %201 = sbr.rel (%p199) target = $region28
      $region27: #{tpu_custom_call.1} parent=23 // pred_region
        %p202 = scmp.lt.s32.totalorder %s19, 1
        %s203 = scalar_select %p202, %s19, 1
        %p204 = scmp.lt.s32.totalorder %s20, 0
        %s205 = scalar_select %p204, %s20, 0
        %s206 = sadd.s32 %s205, %s203
        %s207 = smul.addr %s206, 4
        %s208 = scalar_lea.vmem %s0, %s207
      $region28: #{tpu_custom_call.1} parent=23 // pred_fallthru
        _
      // Predicated region
      $region29: #{tpu_custom_call.1} parent=23 // pred_check
        %p209 = pneg %p74
      $region30: #{tpu_custom_call.1} parent=23 // pred_check_branch
        %211 = sbr.rel (%p209) target = $region32
      $region31: #{tpu_custom_call.1} parent=23 // pred_region
        %p212 = scmp.lt.s32.totalorder %s19, 1
        %s213 = scalar_select %p212, %s19, 1
        %p214 = scmp.lt.s32.totalorder %s20, 0
        %s215 = scalar_select %p214, %s20, 0
        %s216 = sadd.s32 %s215, %s213
        %s217 = smul.addr %s216, 4
        %s218 = scalar_lea.vmem %s1, %s217
      $region32: #{tpu_custom_call.1} parent=23 // pred_fallthru
        _
    $region24: #{tpu_custom_call.1} parent=5 // pred_fallthru
      _
    %p219 = scmp.le.s32.totalorder 1, %s12
    %p220 = scmp.lt.s32.totalorder %s12, 3
    %p221 = pnand %p219, %p220
    %p222 = pneg %p221
    // Predicated region
    $region33: #{tpu_custom_call.1} parent=5 // pred_check
      _
    $region34: #{tpu_custom_call.1} parent=5 // pred_check_branch
      %224 = sbr.rel (%p221) target = $region36
    $region35: #{tpu_custom_call.1} parent=5 // pred_region
      %s225 = ssub.s32 %s12, 1
      %p226 = scmp.lt.s32.totalorder %s21, 1
      %s227 = scalar_select %p226, %s21, 1
      %p228 = scmp.lt.s32.totalorder %s22, 0
      %s229 = scalar_select %p228, %s22, 0
      %s230 = sadd.s32 %s229, %s227
      %s231 = smul.addr %s230, 4
      %s232 = scalar_lea.vmem %s0, %s231
      %p233 = pneg %p52
      %p234 = pneg %p49
      %p235 = scmp.lt.s32.totalorder %s21, 1
      %s236 = scalar_select %p235, %s21, 1
      %p237 = scmp.lt.s32.totalorder %s22, 0
      %s238 = scalar_select %p237, %s22, 0
      %s239 = sadd.s32 %s238, %s236
      %s240 = smul.addr %s239, 4
      %s241 = scalar_lea.vmem %s1, %s240
      %p242 = pneg %p80
      %p243 = pneg %p77
      %p244 = pneg %p101
      %p245 = pneg %p98
      %p246 = pneg %p122
      %p247 = pneg %p119
      %p248 = pneg %p148
      %p249 = pneg %p145
      %p250 = scmp.lt.s32.totalorder %s21, 1
      %s251 = scalar_select %p250, %s21, 1
      %s252 = smul.addr %s251, 8
      %s253 = scalar_lea.vmem %s4, %s252
      %p254 = pneg %p174
      %p255 = pneg %p171
      %p256 = scmp.lt.s32.totalorder %s21, 1
      %s257 = scalar_select %p256, %s21, 1
      %s258 = smul.addr %s257, 8
      %s259 = scalar_lea.vmem %s5, %s258
      %p260 = scmp.lt.s32.totalorder %s21, 1
      %s261 = scalar_select %p260, %s21, 1
      %p262 = scmp.lt.s32.totalorder %s22, 0
      %s263 = scalar_select %p262, %s22, 0
      %s264 = sadd.s32 %s263, %s261
      %s265 = smul.addr %s264, 4
      %s266 = scalar_lea.vmem %s0, %s265
      %p267 = scmp.lt.s32.totalorder %s21, 1
      %s268 = scalar_select %p267, %s21, 1
      %p269 = scmp.lt.s32.totalorder %s22, 0
      %s270 = scalar_select %p269, %s22, 0
      %s271 = sadd.s32 %s270, %s268
      %s272 = smul.addr %s271, 4
      %s273 = scalar_lea.vmem %s1, %s272
      %p274 = scmp.lt.s32.totalorder %s21, 1
      %s275 = scalar_select %p274, %s21, 1
      %s276 = smul.addr %s275, 8
      %s277 = scalar_lea.vmem %s4, %s276
      %p278 = scmp.lt.s32.totalorder %s21, 1
      %s279 = scalar_select %p278, %s21, 1
      %s280 = smul.addr %s279, 8
      %s281 = scalar_lea.vmem %s5, %s280
      %p282 = scmp.eq.s32.totalorder %s22, 0
      // Predicated region
      $region37: #{tpu_custom_call.1} parent=35 // pred_check
        %p283 = pneg %p282
      $region38: #{tpu_custom_call.1} parent=35 // pred_check_branch
        %285 = sbr.rel (%p283) target = $region40
      $region39: #{tpu_custom_call.1} parent=35 // pred_region
        %vm286 = vcmask 7168
        %287 = vst.msk [vmem:[%s277] sm:$0xff] %vm286, 0.0
        %288 = vst.msk [vmem:[%s281] sm:$0xff] %vm286, 0.0
      $region40: #{tpu_custom_call.1} parent=35 // pred_fallthru
        _
      %v289 = vld [vmem:[%s2] sm:$0xff]
      %v290 = vld [vmem:[%s266] sm:$0xf]
      %v291 = vld [vmem:[%s3] sm:$0xff]
      %v292 = vld [vmem:[%s273] sm:$0xf]
      %vm293 = vcmask 31744
      %v295 = vsel %vm293, %v291, 0
      %vm297 = vcmask 1043456
      %v299 = vsel %vm297, %v292, 0
      %301 = vmatprep.subr.mxu0 0.0
      %302 = vmatpush1.msra.mxu0 %v299
      %303 = vmatprep.subr.mxu0 0.0
      %304 = vmatpush1.msra.mxu0 0.0
      %305 = vmatprep.subr.mxu0 0.0
      %306 = vmatpush1.msra.mxu0 0.0
      %307 = vmatprep.subr.mxu0 0.0
      %308 = vmatpush1.msra.mxu0 0.0
      %309 = vmatprep.subr.mxu0 0.0
      %310 = vmatpush1.msra.mxu0 0.0
      %311 = vmatprep.subr.mxu0 0.0
      %312 = vmatpush1.msra.mxu0 0.0
      %313 = vmatprep.subr.mxu0 0.0
      %314 = vmatpush1.msra.mxu0 0.0
      %315 = vmatprep.subr.mxu0 0.0
      %316 = vmatpush1.msra.mxu0 0.0
      %317 = vmatprep.subr.mxu0 0.0
      %318 = vmatpush1.msra.mxu0 0.0
      %319 = vmatprep.subr.mxu0 0.0
      %320 = vmatpush1.msra.mxu0 0.0
      %321 = vmatprep.subr.mxu0 0.0
      %322 = vmatpush1.msra.mxu0 0.0
      %323 = vmatprep.subr.mxu0 0.0
      %324 = vmatpush1.msra.mxu0 0.0
      %325 = vmatprep.subr.mxu0 0.0
      %326 = vmatpush1.msra.mxu0 0.0
      %327 = vmatprep.subr.mxu0 0.0
      %328 = vmatpush1.msra.mxu0 0.0
      %329 = vmatprep.subr.mxu0 0.0
      %330 = vmatpush1.msra.mxu0 0.0
      %331 = vmatprep.subr.mxu0 0.0
      %332 = vmatpush1.msra.mxu0 0.0
      %333 = vmatprep.subr.mxu0 0.0
      %334 = vmatpush1.msra.mxu0 0.0
      %335 = vmatprep.subr.mxu0 0.0
      %336 = vmatpush1.msra.mxu0 0.0
      %337 = vmatprep.subr.mxu0 0.0
      %338 = vmatpush1.msra.mxu0 0.0
      %339 = vmatprep.subr.mxu0 0.0
      %340 = vmatpush1.msra.mxu0 0.0
      %341 = vmatprep.subr.mxu0 0.0
      %342 = vmatpush1.msra.mxu0 0.0
      %343 = vmatprep.subr.mxu0 0.0
      %344 = vmatpush1.msra.mxu0 0.0
      %345 = vmatprep.subr.mxu0 0.0
      %346 = vmatpush1.msra.mxu0 0.0
      %347 = vmatprep.subr.mxu0 0.0
      %348 = vmatpush1.msra.mxu0 0.0
      %349 = vmatprep.subr.mxu0 0.0
      %350 = vmatpush1.msra.mxu0 0.0
      %351 = vmatprep.subr.mxu0 0.0
      %352 = vmatpush1.msra.mxu0 0.0
      %353 = vmatprep.subr.mxu0 0.0
      %354 = vmatpush1.msra.mxu0 0.0
      %355 = vmatprep.subr.mxu0 0.0
      %356 = vmatpush1.msra.mxu0 0.0
      %357 = vmatprep.subr.mxu0 0.0
      %358 = vmatpush1.msra.mxu0 0.0
      %359 = vmatprep.subr.mxu0 0.0
      %360 = vmatpush1.msra.mxu0 0.0
      %361 = vmatprep.subr.mxu0 0.0
      %362 = vmatpush1.msra.mxu0 0.0
      %363 = vmatprep.subr.mxu0 0.0
      %364 = vmatpush1.msra.mxu0 0.0
      %365 = vmatprep.mubr.f32.mxu0 0.0
      %366 = vmatmul.mubr.f32.gmra.mrb[0].mxu0 %v295
      %v367 = vpop.f32.mrb[0].mxu0
      %v368 = vadd.f32 0.0, %v367
      %v369 = vpop.f32.mrb[0].mxu0
      %370 = vdwg.mxu0
      %v372 = vsel %vm293, %v289, 0
      %v375 = vsel %vm297, %v290, 0
      %377 = vmatprep.subr.mxu0 0.0
      %378 = vmatpush1.msra.mxu0 %v375
      %379 = vmatprep.subr.mxu0 0.0
      %380 = vmatpush1.msra.mxu0 0.0
      %381 = vmatprep.subr.mxu0 0.0
      %382 = vmatpush1.msra.mxu0 0.0
      %383 = vmatprep.subr.mxu0 0.0
      %384 = vmatpush1.msra.mxu0 0.0
      %385 = vmatprep.subr.mxu0 0.0
      %386 = vmatpush1.msra.mxu0 0.0
      %387 = vmatprep.subr.mxu0 0.0
      %388 = vmatpush1.msra.mxu0 0.0
      %389 = vmatprep.subr.mxu0 0.0
      %390 = vmatpush1.msra.mxu0 0.0
      %391 = vmatprep.subr.mxu0 0.0
      %392 = vmatpush1.msra.mxu0 0.0
      %393 = vmatprep.subr.mxu0 0.0
      %394 = vmatpush1.msra.mxu0 0.0
      %395 = vmatprep.subr.mxu0 0.0
      %396 = vmatpush1.msra.mxu0 0.0
      %397 = vmatprep.subr.mxu0 0.0
      %398 = vmatpush1.msra.mxu0 0.0
      %399 = vmatprep.subr.mxu0 0.0
      %400 = vmatpush1.msra.mxu0 0.0
      %401 = vmatprep.subr.mxu0 0.0
      %402 = vmatpush1.msra.mxu0 0.0
      %403 = vmatprep.subr.mxu0 0.0
      %404 = vmatpush1.msra.mxu0 0.0
      %405 = vmatprep.subr.mxu0 0.0
      %406 = vmatpush1.msra.mxu0 0.0
      %407 = vmatprep.subr.mxu0 0.0
      %408 = vmatpush1.msra.mxu0 0.0
      %409 = vmatprep.subr.mxu0 0.0
      %410 = vmatpush1.msra.mxu0 0.0
      %411 = vmatprep.subr.mxu0 0.0
      %412 = vmatpush1.msra.mxu0 0.0
      %413 = vmatprep.subr.mxu0 0.0
      %414 = vmatpush1.msra.mxu0 0.0
      %415 = vmatprep.subr.mxu0 0.0
      %416 = vmatpush1.msra.mxu0 0.0
      %417 = vmatprep.subr.mxu0 0.0
      %418 = vmatpush1.msra.mxu0 0.0
      %419 = vmatprep.subr.mxu0 0.0
      %420 = vmatpush1.msra.mxu0 0.0
      %421 = vmatprep.subr.mxu0 0.0
      %422 = vmatpush1.msra.mxu0 0.0
      %423 = vmatprep.subr.mxu0 0.0
      %424 = vmatpush1.msra.mxu0 0.0
      %425 = vmatprep.subr.mxu0 0.0
      %426 = vmatpush1.msra.mxu0 0.0
      %427 = vmatprep.subr.mxu0 0.0
      %428 = vmatpush1.msra.mxu0 0.0
      %429 = vmatprep.subr.mxu0 0.0
      %430 = vmatpush1.msra.mxu0 0.0
      %431 = vmatprep.subr.mxu0 0.0
      %432 = vmatpush1.msra.mxu0 0.0
      %433 = vmatprep.subr.mxu0 0.0
      %434 = vmatpush1.msra.mxu0 0.0
      %435 = vmatprep.subr.mxu0 0.0
      %436 = vmatpush1.msra.mxu0 0.0
      %437 = vmatprep.subr.mxu0 0.0
      %438 = vmatpush1.msra.mxu0 0.0
      %439 = vmatprep.subr.mxu0 0.0
      %440 = vmatpush1.msra.mxu0 0.0
      %441 = vmatprep.mubr.f32.mxu0 0.0
      %442 = vmatmul.mubr.f32.gmra.mrb[0].mxu0 %v372
      %v443 = vpop.f32.mrb[0].mxu0
      %v444 = vadd.f32 %v368, %v443
      %v445 = vpop.f32.mrb[0].mxu0
      %446 = vdwg.mxu0
      %v447 = vld [vmem:[%s277] sm:$0xff]
      %vm448 = vcmask 523264
      %v449 = vsel %vm448, %v444, 0.0
      %450 = vadd.xlane.f32.xlu0 %v449
      %v451 = vpop.xlane.xlu0 %450
      %v452 = vadd.f32 %v447, %v451
      %vm453 = vcmask 7168
      %454 = vst.msk [vmem:[%s277] sm:$0xff] %vm453, %v452
      %v455 = vld [vmem:[%s281] sm:$0xff]
      %v456 = vmul.f32 %v444, %v444
      %v457 = vsel %vm448, %v456, 0.0
      %458 = vadd.xlane.f32.xlu0 %v457
      %v459 = vpop.xlane.xlu0 %458
      %v460 = vadd.f32 %v455, %v459
      %461 = vst.msk [vmem:[%s281] sm:$0xff] %vm453, %v460
      %p462 = scmp.lt.s32.totalorder %s21, 1
      %s463 = scalar_select %p462, %s21, 1
      %s464 = smul.addr %s463, 8
      %s465 = scalar_lea.vmem %s4, %s464
      %p466 = scmp.lt.s32.totalorder %s21, 1
      %s467 = scalar_select %p466, %s21, 1
      %s468 = smul.addr %s467, 8
      %s469 = scalar_lea.vmem %s5, %s468
      // Predicated region
      $region41: #{tpu_custom_call.1} parent=35 // pred_check
        %p470 = pneg %p145
      $region42: #{tpu_custom_call.1} parent=35 // pred_check_branch
        %472 = sbr.rel (%p470) target = $region44
      $region43: #{tpu_custom_call.1} parent=35 // pred_region
        _
      $region44: #{tpu_custom_call.1} parent=35 // pred_fallthru
        _
      // Predicated region
      $region45: #{tpu_custom_call.1} parent=35 // pred_check
        %p473 = pneg %p171
      $region46: #{tpu_custom_call.1} parent=35 // pred_check_branch
        %475 = sbr.rel (%p473) target = $region48
      $region47: #{tpu_custom_call.1} parent=35 // pred_region
        _
      $region48: #{tpu_custom_call.1} parent=35 // pred_fallthru
        _
    $region36: #{tpu_custom_call.1} parent=5 // pred_fallthru
      _
    %p476 = scmp.le.s32.totalorder 2, %s12
    // Predicated region
    $region49: #{tpu_custom_call.1} parent=5 // pred_check
      %p477 = pneg %p476
    $region50: #{tpu_custom_call.1} parent=5 // pred_check_branch
      %479 = sbr.rel (%p477) target = $region52
    $region51: #{tpu_custom_call.1} parent=5 // pred_region
      %s480 = ssub.s32 %s12, 2
      // Predicated region
      $region53: #{tpu_custom_call.1} parent=51 // pred_check
        %p481 = pneg %p151
      $region54: #{tpu_custom_call.1} parent=51 // pred_check_branch
        %483 = sbr.rel (%p481) target = $region56
      $region55: #{tpu_custom_call.1} parent=51 // pred_region
        %p484 = scmp.lt.s32.totalorder %s23, 1
        %s485 = scalar_select %p484, %s23, 1
        %s486 = smul.addr %s485, 8
        %s487 = scalar_lea.vmem %s4, %s486
      $region56: #{tpu_custom_call.1} parent=51 // pred_fallthru
        _
      // Predicated region
      $region57: #{tpu_custom_call.1} parent=51 // pred_check
        %p488 = pneg %p177
      $region58: #{tpu_custom_call.1} parent=51 // pred_check_branch
        %490 = sbr.rel (%p488) target = $region60
      $region59: #{tpu_custom_call.1} parent=51 // pred_region
        %p491 = scmp.lt.s32.totalorder %s23, 1
        %s492 = scalar_select %p491, %s23, 1
        %s493 = smul.addr %s492, 8
        %s494 = scalar_lea.vmem %s5, %s493
      $region60: #{tpu_custom_call.1} parent=51 // pred_fallthru
        _
    $region52: #{tpu_custom_call.1} parent=5 // pred_fallthru
      _
  $region6: #{tpu_custom_call.1} parent=0 // loop_footer
    %s16 = sadd.s32 1, %s12
  $region7: #{tpu_custom_call.1} parent=0 // loop_footer_branch
    %11 = sbr.rel target = $region3
  $region8: #{tpu_custom_call.1} parent=0 // loop_exit
    _

</llo_original>
